<compile_context>
chip_gen: v7x
topology: tpu7x:2x2x1
jax: 0.10.0
libtpu: 0.0.40
codegen_flags: <defaults>
</compile_context>

<pallas_src>
import functools

import jax
import jax.numpy as jnp
from jax.experimental import pallas as pl
from jax.experimental.pallas import tpu as pltpu


def _gemm_bn_relu_kernel(p_ref, w_ref, gamma_ref, beta_ref, out_ref, *, eps):
    """One Cout block: (M,K)@(K,CB) GEMM -> train-mode BN over M -> ReLU.

    p_ref:     (M, K)   bf16 im2col patches (lane axis = K, built in wrapper)
    w_ref:     (K, CB)  bf16 weights of this Cout block (im2col layout)
    gamma_ref: (1, CB)  f32 BN weight
    beta_ref:  (1, CB)  f32 BN bias
    out_ref:   (M, CB)  output block
    """
    # Single MXU contraction, bf16 operands, f32 accumulation.
    acc = jnp.dot(p_ref[...], w_ref[...],
                  preferred_element_type=jnp.float32)          # (M, CB) f32

    m = acc.shape[0]
    inv_m = jnp.float32(1.0 / m)

    # Single-pass biased batch statistics per channel (sums kept in f32).
    s1 = jnp.sum(acc, axis=0, keepdims=True)                   # (1, CB)
    s2 = jnp.sum(acc * acc, axis=0, keepdims=True)             # (1, CB)
    mean = s1 * inv_m
    var = s2 * inv_m - mean * mean                             # E[x^2]-mean^2
    inv = jax.lax.rsqrt(var + eps)

    # BN folded into one per-channel scale/shift, then ReLU (single pass).
    scale = gamma_ref[...] * inv                               # (1, CB)
    shift = beta_ref[...] - mean * scale
    out_ref[...] = jnp.maximum(acc * scale + shift, 0.0).astype(out_ref.dtype)


def conv_bn_relu(x_nchw, w_oihw, gamma, beta, *, padding=1, eps=1e-5,
                 out_dtype=jnp.float32):
    """NCHW / OIHW (PyTorch convention) in, NCHW out.  stride=1 only.

    The NCHW<->NHWC transposes are interface glue to match the PyTorch module;
    a surrounding NHWC model could drop them (and pass out_dtype=bfloat16) to
    cut two full-tensor HBM passes on this memory-bound op.
    """
    N, Cin, H, W = x_nchw.shape
    Cout, _, KH, KW = w_oihw.shape
    # TODO(synk): stride > 1 not implemented (module default is stride=1).

    Ho = H + 2 * padding - KH + 1
    Wo = W + 2 * padding - KW + 1
    M = N * Ho * Wo
    K = KH * KW * Cin

    # --- chip-aware tile / VMEM settings (build-time hardware query only;
    # no runtime fallback path, no host sync) ------------------------------
    try:
        vmem_cap = int(pltpu.get_tpu_info().vmem_capacity_bytes)
    except Exception:
        vmem_cap = 64 * 1024 * 1024          # conservative (v7x-sized) default
    vmem_limit = min(vmem_cap * 3 // 4, 100 * 1024 * 1024)

    if Cout <= 128:
        # Block == full channel dim: legal store, zero write amplification.
        CB = Cout
    elif Cout % 256 == 0 and vmem_cap >= (100 << 20):
        CB = 256                              # v5e/v6e: match 256-wide MXU tile
    else:
        CB = 128
    n_cblk = pl.cdiv(Cout, CB)
    Cout_p = n_cblk * CB

    # --- layout glue (XLA, once per call): lane-dense bf16 im2col so the
    # kernel is a plain GEMM; no halo / unaligned concatenate inside Pallas --
    x_nhwc = jnp.transpose(x_nchw, (0, 2, 3, 1))
    xp = jnp.pad(x_nhwc,
                 ((0, 0), (padding, padding), (padding, padding), (0, 0)))
    taps = [xp[:, kh:kh + Ho, kw:kw + Wo, :]
            for kh in range(KH) for kw in range(KW)]
    patches = (jnp.concatenate(taps, axis=-1)
               .reshape(M, K).astype(jnp.bfloat16))            # (M, K)

    # OIHW -> (KH, KW, Cin, Cout) -> (K, Cout); same K ordering as `taps`.
    w2 = (jnp.transpose(w_oihw, (2, 3, 1, 0))
          .reshape(K, Cout).astype(jnp.bfloat16))
    gamma2 = gamma.astype(jnp.float32).reshape(1, Cout)
    beta2 = beta.astype(jnp.float32).reshape(1, Cout)
    if Cout_p != Cout:
        w2 = jnp.pad(w2, ((0, 0), (0, Cout_p - Cout)))
        gamma2 = jnp.pad(gamma2, ((0, 0), (0, Cout_p - Cout)))
        beta2 = jnp.pad(beta2, ((0, 0), (0, Cout_p - Cout)))

    # Constant index_map -> patches are DMA'd once; single-buffer them when
    # there is more than one channel-block grid step (double-buffering the
    # largest operand buys nothing and wastes VMEM, esp. on v7x's 64 MiB).
    p_kwargs = {"pipeline_mode": pl.Buffered(1)} if n_cblk > 1 else {}

    out_p = pl.pallas_call(
        functools.partial(_gemm_bn_relu_kernel, eps=eps),
        out_shape=jax.ShapeDtypeStruct((M, Cout_p), out_dtype),
        grid_spec=pltpu.PrefetchScalarGridSpec(
            num_scalar_prefetch=0,
            grid=(n_cblk,),
            in_specs=[
                pl.BlockSpec((M, K), lambda c: (0, 0), **p_kwargs),
                pl.BlockSpec((K, CB), lambda c: (0, c)),
                pl.BlockSpec((1, CB), lambda c: (0, c)),
                pl.BlockSpec((1, CB), lambda c: (0, c)),
            ],
            out_specs=pl.BlockSpec((M, CB), lambda c: (0, c))),
        compiler_params=pltpu.CompilerParams(
            dimension_semantics=("parallel",),   # Cout blocks -> both TCs
            vmem_limit_bytes=vmem_limit),
    )(patches, w2, gamma2, beta2)

    out = out_p[:, :Cout].reshape(N, Ho, Wo, Cout)   # drop channel padding
    return jnp.transpose(out, (0, 3, 1, 2))          # back to NCHW


def _reference(x_nchw, w_oihw, gamma, beta, *, padding=1, eps=1e-5):
    """Pure-JAX reference: conv (same bf16 operands / f32 accumulation as the
    kernel) -> train-mode BN (biased batch stats) -> ReLU."""
    y = jax.lax.conv_general_dilated(
        x_nchw.astype(jnp.bfloat16), w_oihw.astype(jnp.bfloat16),
        window_strides=(1, 1),
        padding=((padding, padding), (padding, padding)),
        dimension_numbers=("NCHW", "OIHW", "NCHW"),
        preferred_element_type=jnp.float32)
    mean = jnp.mean(y, axis=(0, 2, 3), keepdims=True)
    var = jnp.mean(jnp.square(y - mean), axis=(0, 2, 3), keepdims=True)
    yn = (y - mean) * jax.lax.rsqrt(var + eps)
    yn = yn * gamma.reshape(1, -1, 1, 1) + beta.reshape(1, -1, 1, 1)
    return jnp.maximum(yn, 0.0)


if __name__ == "__main__":
    key = jax.random.PRNGKey(0)
    k_x, k_w = jax.random.split(key)

    N, Cin, Cout, H, W, KS = 2, 4, 8, 16, 16, 3

    x = jax.random.normal(k_x, (N, Cin, H, W), dtype=jnp.float32)

    # Conv2d weight: kaiming_normal_(a=1) -> gain=1, std = 1/sqrt(Cin*KS*KS).
    std = 1.0 / jnp.sqrt(jnp.float32(Cin * KS * KS))
    w = jax.random.normal(k_w, (Cout, Cin, KS, KS), dtype=jnp.float32) * std

    # BatchNorm2d default init: weight (gamma) = 1, bias (beta) = 0.
    gamma = jnp.ones((Cout,), dtype=jnp.float32)
    beta = jnp.zeros((Cout,), dtype=jnp.float32)

    out = conv_bn_relu(x, w, gamma, beta, padding=1, eps=1e-5)
    out = jax.block_until_ready(out)

    ref = _reference(x, w, gamma, beta, padding=1, eps=1e-5)
    assert out.shape == (N, Cout, H, W)
    assert jnp.allclose(out, ref, atol=2e-4, rtol=2e-4), "mismatch vs reference"

    print("KERNEL_OK")
</pallas_src>

<mosaic_0001>
module attributes {stable_mosaic.version = 11 : i64} {
  func.func @_gemm_bn_relu_kernel(%arg0: i32, %arg1: memref<512x36xbf16, #tpu.memory_space<vmem>>, %arg2: memref<36x8xbf16, #tpu.memory_space<vmem>>, %arg3: memref<1x8xf32, #tpu.memory_space<vmem>>, %arg4: memref<1x8xf32, #tpu.memory_space<vmem>>, %arg5: memref<512x8xf32, #tpu.memory_space<vmem>>) attributes {dimension_semantics = [#tpu.dimension_semantics<parallel>], iteration_bounds = array<i64: 1>, scalar_prefetch = 0 : i64, scratch_operands = 0 : i64, tpu.core_type = #tpu.core_type<tc>, window_params = [{pipeline_mode = #tpu.pipeline_mode<synchronous>, transform_indices = @transform_0, window_bounds = array<i64: 512, 36>}, {transform_indices = @transform_1, window_bounds = array<i64: 36, 8>}, {transform_indices = @transform_2, window_bounds = array<i64: 1, 8>}, {transform_indices = @transform_3, window_bounds = array<i64: 1, 8>}, {transform_indices = @transform_4, window_bounds = array<i64: 512, 8>}]} {
    %c0 = arith.constant 0 : index
    %c0_0 = arith.constant 0 : index
    %0 = vector.load %arg1[%c0, %c0_0] : memref<512x36xbf16, #tpu.memory_space<vmem>>, vector<512x36xbf16>
    %c0_1 = arith.constant 0 : index
    %c0_2 = arith.constant 0 : index
    %1 = vector.load %arg2[%c0_1, %c0_2] : memref<36x8xbf16, #tpu.memory_space<vmem>>, vector<36x8xbf16>
    %cst = arith.constant dense<0.000000e+00> : vector<512x8xf32>
    %2 = tpu.matmul %0, %1, %cst {dimension_numbers = #tpu.dot_dimension_numbers<[1], [0], [0], [1], [0, 0, 1, 1], [], []>} : vector<512x36xbf16>, vector<36x8xbf16>, vector<512x8xf32> -> vector<512x8xf32>
    %cst_3 = arith.constant dense<0.000000e+00> : vector<8xf32>
    %3 = vector.multi_reduction <add>, %2, %cst_3 [0] : vector<512x8xf32> to vector<8xf32>
    %4 = vector.shape_cast %3 : vector<8xf32> to vector<1x8xf32>
    %5 = arith.mulf %2, %2 : vector<512x8xf32>
    %cst_4 = arith.constant dense<0.000000e+00> : vector<8xf32>
    %6 = vector.multi_reduction <add>, %5, %cst_4 [0] : vector<512x8xf32> to vector<8xf32>
    %7 = vector.shape_cast %6 : vector<8xf32> to vector<1x8xf32>
    %cst_5 = arith.constant 0.001953125 : f32
    %8 = vector.broadcast %cst_5 : f32 to vector<1x8xf32>
    %9 = arith.mulf %4, %8 : vector<1x8xf32>
    %cst_6 = arith.constant 0.001953125 : f32
    %10 = vector.broadcast %cst_6 : f32 to vector<1x8xf32>
    %11 = arith.mulf %7, %10 : vector<1x8xf32>
    %12 = arith.mulf %9, %9 : vector<1x8xf32>
    %13 = arith.subf %11, %12 : vector<1x8xf32>
    %cst_7 = arith.constant 9.99999974E-6 : f32
    %14 = vector.broadcast %cst_7 : f32 to vector<1x8xf32>
    %15 = arith.addf %13, %14 : vector<1x8xf32>
    %16 = math.rsqrt %15 : vector<1x8xf32>
    %c0_8 = arith.constant 0 : index
    %c0_9 = arith.constant 0 : index
    %17 = vector.load %arg3[%c0_8, %c0_9] : memref<1x8xf32, #tpu.memory_space<vmem>>, vector<1x8xf32>
    %18 = arith.mulf %17, %16 : vector<1x8xf32>
    %c0_10 = arith.constant 0 : index
    %c0_11 = arith.constant 0 : index
    %19 = vector.load %arg4[%c0_10, %c0_11] : memref<1x8xf32, #tpu.memory_space<vmem>>, vector<1x8xf32>
    %20 = arith.mulf %9, %18 : vector<1x8xf32>
    %21 = arith.subf %19, %20 : vector<1x8xf32>
    %22 = vector.broadcast %18 : vector<1x8xf32> to vector<512x8xf32>
    %23 = arith.mulf %2, %22 : vector<512x8xf32>
    %24 = vector.broadcast %21 : vector<1x8xf32> to vector<512x8xf32>
    %25 = arith.addf %23, %24 : vector<512x8xf32>
    %cst_12 = arith.constant 0.000000e+00 : f32
    %26 = vector.broadcast %cst_12 : f32 to vector<512x8xf32>
    %27 = arith.maximumf %25, %26 : vector<512x8xf32>
    %c0_13 = arith.constant 0 : index
    %c0_14 = arith.constant 0 : index
    %28 = vector.load %arg5[%c0_13, %c0_14] : memref<512x8xf32, #tpu.memory_space<vmem>>, vector<512x8xf32>
    tpu.vector_store %arg5[%c0_13, %c0_14], %27 {strides = array<i32>} : memref<512x8xf32, #tpu.memory_space<vmem>>, vector<512x8xf32>,
    return
  }
  func.func @transform_0(%arg0: i32) -> (i32, i32) {
    %c0_i32 = arith.constant 0 : i32
    %c0_i32_0 = arith.constant 0 : i32
    %c0_i32_1 = arith.constant 0 : i32
    return %c0_i32, %c0_i32_0 : i32, i32
  }
  func.func @transform_1(%arg0: i32) -> (i32, i32) {
    %c0_i32 = arith.constant 0 : i32
    %c0_i32_0 = arith.constant 0 : i32
    return %c0_i32, %arg0 : i32, i32
  }
  func.func @transform_2(%arg0: i32) -> (i32, i32) {
    %c0_i32 = arith.constant 0 : i32
    %c0_i32_0 = arith.constant 0 : i32
    return %c0_i32, %arg0 : i32, i32
  }
  func.func @transform_3(%arg0: i32) -> (i32, i32) {
    %c0_i32 = arith.constant 0 : i32
    %c0_i32_0 = arith.constant 0 : i32
    return %c0_i32, %arg0 : i32, i32
  }
  func.func @transform_4(%arg0: i32) -> (i32, i32) {
    %c0_i32 = arith.constant 0 : i32
    %c0_i32_0 = arith.constant 0 : i32
    return %c0_i32, %arg0 : i32, i32
  }
}

</mosaic_0001>

<llo_original>
// kernel: tpu_custom_call.1
$region0: #{tpu_custom_call.1}
  #allocation0 [shape = 'u32[]', space=smem, size = 0x4, offset = 0x4, fixed_abs, tag = 'smem constant byte address 0x4 - core index']
  #allocation1 [shape = 'u32[144,128]{1,0:T(1,128)}', space=vmem, size = 0x12000, scoped, tag = 'internal scratch']
  %s0 = inlined_call_operand.vmem [shape: bf16[512,36], index: 0, kind: input, shape index: {}]
  %s1 = inlined_call_operand.vmem [shape: bf16[36,8], index: 1, kind: input, shape index: {}]
  %s2 = inlined_call_operand.vmem [shape: f32[1,8], index: 2, kind: input, shape index: {}]
  %s3 = inlined_call_operand.vmem [shape: f32[1,8], index: 3, kind: input, shape index: {}]
  %s4 = inlined_call_operand.vmem [shape: f32[512,8], index: 4, kind: output, shape index: {}]
  %s5 = sld [smem:[#allocation0]]
  $region26: #{tpu_custom_call.1} parent=0
    _
  %s7 = ssub.s32 1, %s5
  %s8 = scalar_select 0, %s7, %s5
  // Predicated region
  $region2: #{tpu_custom_call.1} parent=0 // pred_check
    _
  $region3: #{tpu_custom_call.1} parent=0 // pred_check_branch
    %10 = sbr.rel (0) target = $region5
  $region4: #{tpu_custom_call.1} parent=0 // pred_region
    _
  $region5: #{tpu_custom_call.1} parent=0 // pred_fallthru
    _
  // Predicated region
  $region6: #{tpu_custom_call.1} parent=0 // pred_check
    _
  $region7: #{tpu_custom_call.1} parent=0 // pred_check_branch
    %12 = sbr.rel (0) target = $region9
  $region8: #{tpu_custom_call.1} parent=0 // pred_region
    _
  $region9: #{tpu_custom_call.1} parent=0 // pred_fallthru
    _
  // Predicated region
  $region10: #{tpu_custom_call.1} parent=0 // pred_check
    _
  $region11: #{tpu_custom_call.1} parent=0 // pred_check_branch
    %14 = sbr.rel (0) target = $region13
  $region12: #{tpu_custom_call.1} parent=0 // pred_region
    _
  $region13: #{tpu_custom_call.1} parent=0 // pred_fallthru
    _
  // Predicated region
  $region14: #{tpu_custom_call.1} parent=0 // pred_check
    _
  $region15: #{tpu_custom_call.1} parent=0 // pred_check_branch
    %16 = sbr.rel (0) target = $region17
  $region16: #{tpu_custom_call.1} parent=0 // pred_region
    _
  $region17: #{tpu_custom_call.1} parent=0 // pred_fallthru
    _
  %v18 = vld [vmem:[%s0] sm:$0xf]
  %v19 = vld [vmem:[%s0 + $0x4] sm:$0xf]
  %v20 = vld [vmem:[%s0 + $0x8] sm:$0xf]
  %v21 = vld [vmem:[%s0 + $0xc] sm:$0xf]
  %v22 = vld [vmem:[%s0 + $0x10] sm:$0xf]
  %v23 = vld [vmem:[%s0 + $0x14] sm:$0xf]
  %v24 = vld [vmem:[%s0 + $0x18] sm:$0xf]
  %v25 = vld [vmem:[%s0 + $0x1c] sm:$0xf]
  %v26 = vld [vmem:[%s0 + $0x20] sm:$0xf]
  %v27 = vld [vmem:[%s0 + $0x24] sm:$0xf]
  %v28 = vld [vmem:[%s0 + $0x28] sm:$0xf]
  %v29 = vld [vmem:[%s0 + $0x2c] sm:$0xf]
  %v30 = vld [vmem:[%s0 + $0x30] sm:$0xf]
  %v31 = vld [vmem:[%s0 + $0x34] sm:$0xf]
  %v32 = vld [vmem:[%s0 + $0x38] sm:$0xf]
  %v33 = vld [vmem:[%s0 + $0x3c] sm:$0xf]
  %v34 = vld [vmem:[%s0 + $0x40] sm:$0xf]
  %v35 = vld [vmem:[%s0 + $0x44] sm:$0xf]
  %v36 = vld [vmem:[%s0 + $0x48] sm:$0xf]
  %v37 = vld [vmem:[%s0 + $0x4c] sm:$0xf]
  %v38 = vld [vmem:[%s0 + $0x50] sm:$0xf]
  %v39 = vld [vmem:[%s0 + $0x54] sm:$0xf]
  %v40 = vld [vmem:[%s0 + $0x58] sm:$0xf]
  %v41 = vld [vmem:[%s0 + $0x5c] sm:$0xf]
  %v42 = vld [vmem:[%s0 + $0x60] sm:$0xf]
  %v43 = vld [vmem:[%s0 + $0x64] sm:$0xf]
  %v44 = vld [vmem:[%s0 + $0x68] sm:$0xf]
  %v45 = vld [vmem:[%s0 + $0x6c] sm:$0xf]
  %v46 = vld [vmem:[%s0 + $0x70] sm:$0xf]
  %v47 = vld [vmem:[%s0 + $0x74] sm:$0xf]
  %v48 = vld [vmem:[%s0 + $0x78] sm:$0xf]
  %v49 = vld [vmem:[%s0 + $0x7c] sm:$0xf]
  %v50 = vld [vmem:[%s0 + $0x80] sm:$0xf]
  %v51 = vld [vmem:[%s0 + $0x84] sm:$0xf]
  %v52 = vld [vmem:[%s0 + $0x88] sm:$0xf]
  %v53 = vld [vmem:[%s0 + $0x8c] sm:$0xf]
  %v54 = vld [vmem:[%s0 + $0x90] sm:$0xf]
  %v55 = vld [vmem:[%s0 + $0x94] sm:$0xf]
  %v56 = vld [vmem:[%s0 + $0x98] sm:$0xf]
  %v57 = vld [vmem:[%s0 + $0x9c] sm:$0xf]
  %v58 = vld [vmem:[%s0 + $0xa0] sm:$0xf]
  %v59 = vld [vmem:[%s0 + $0xa4] sm:$0xf]
  %v60 = vld [vmem:[%s0 + $0xa8] sm:$0xf]
  %v61 = vld [vmem:[%s0 + $0xac] sm:$0xf]
  %v62 = vld [vmem:[%s0 + $0xb0] sm:$0xf]
  %v63 = vld [vmem:[%s0 + $0xb4] sm:$0xf]
  %v64 = vld [vmem:[%s0 + $0xb8] sm:$0xf]
  %v65 = vld [vmem:[%s0 + $0xbc] sm:$0xf]
  %v66 = vld [vmem:[%s0 + $0xc0] sm:$0xf]
  %v67 = vld [vmem:[%s0 + $0xc4] sm:$0xf]
  %v68 = vld [vmem:[%s0 + $0xc8] sm:$0xf]
  %v69 = vld [vmem:[%s0 + $0xcc] sm:$0xf]
  %v70 = vld [vmem:[%s0 + $0xd0] sm:$0xf]
  %v71 = vld [vmem:[%s0 + $0xd4] sm:$0xf]
  %v72 = vld [vmem:[%s0 + $0xd8] sm:$0xf]
  %v73 = vld [vmem:[%s0 + $0xdc] sm:$0xf]
  %v74 = vld [vmem:[%s0 + $0xe0] sm:$0xf]
  %v75 = vld [vmem:[%s0 + $0xe4] sm:$0xf]
  %v76 = vld [vmem:[%s0 + $0xe8] sm:$0xf]
  %v77 = vld [vmem:[%s0 + $0xec] sm:$0xf]
  %v78 = vld [vmem:[%s0 + $0xf0] sm:$0xf]
  %v79 = vld [vmem:[%s0 + $0xf4] sm:$0xf]
  %v80 = vld [vmem:[%s0 + $0xf8] sm:$0xf]
  %v81 = vld [vmem:[%s0 + $0xfc] sm:$0xf]
  %v82 = vld [vmem:[%s1] sm:$0xf]
  %v83 = vld [vmem:[%s1 + $0x4] sm:$0xf]
  %v84 = vld [vmem:[%s1 + $0x8] sm:$0xf]
  %v85 = vld [vmem:[%s1 + $0xc] sm:$0xf]
  %v86 = vld [vmem:[%s1 + $0x10] sm:$0x3]
  %v151 = vunpack.c.l.b16 %v18
  %v152 = vunpack.c.l.b16 %v19
  %v153 = vunpack.c.l.b16 %v20
  %v154 = vunpack.c.l.b16 %v21
  %v155 = vunpack.c.l.b16 %v22
  %v156 = vunpack.c.l.b16 %v23
  %v157 = vunpack.c.l.b16 %v24
  %v158 = vunpack.c.l.b16 %v25
  %v159 = vunpack.c.l.b16 %v26
  %v160 = vunpack.c.l.b16 %v27
  %v161 = vunpack.c.l.b16 %v28
  %v162 = vunpack.c.l.b16 %v29
  %v163 = vunpack.c.l.b16 %v30
  %v164 = vunpack.c.l.b16 %v31
  %v165 = vunpack.c.l.b16 %v32
  %v166 = vunpack.c.l.b16 %v33
  %v167 = vunpack.c.l.b16 %v34
  %v168 = vunpack.c.l.b16 %v35
  %v169 = vunpack.c.l.b16 %v36
  %v170 = vunpack.c.l.b16 %v37
  %v171 = vunpack.c.l.b16 %v38
  %v172 = vunpack.c.l.b16 %v39
  %v173 = vunpack.c.l.b16 %v40
  %v174 = vunpack.c.l.b16 %v41
  %v175 = vunpack.c.l.b16 %v42
  %v176 = vunpack.c.l.b16 %v43
  %v177 = vunpack.c.l.b16 %v44
  %v178 = vunpack.c.l.b16 %v45
  %v179 = vunpack.c.l.b16 %v46
  %v180 = vunpack.c.l.b16 %v47
  %v181 = vunpack.c.l.b16 %v48
  %v182 = vunpack.c.l.b16 %v49
  %v183 = vunpack.c.l.b16 %v50
  %v184 = vunpack.c.l.b16 %v51
  %v185 = vunpack.c.l.b16 %v52
  %v186 = vunpack.c.l.b16 %v53
  %v187 = vunpack.c.l.b16 %v54
  %v188 = vunpack.c.l.b16 %v55
  %v189 = vunpack.c.l.b16 %v56
  %v190 = vunpack.c.l.b16 %v57
  %v191 = vunpack.c.l.b16 %v58
  %v192 = vunpack.c.l.b16 %v59
  %v193 = vunpack.c.l.b16 %v60
  %v194 = vunpack.c.l.b16 %v61
  %v195 = vunpack.c.l.b16 %v62
  %v196 = vunpack.c.l.b16 %v63
  %v197 = vunpack.c.l.b16 %v64
  %v198 = vunpack.c.l.b16 %v65
  %v199 = vunpack.c.l.b16 %v66
  %v200 = vunpack.c.l.b16 %v67
  %v201 = vunpack.c.l.b16 %v68
  %v202 = vunpack.c.l.b16 %v69
  %v203 = vunpack.c.l.b16 %v70
  %v204 = vunpack.c.l.b16 %v71
  %v205 = vunpack.c.l.b16 %v72
  %v206 = vunpack.c.l.b16 %v73
  %v207 = vunpack.c.l.b16 %v74
  %v208 = vunpack.c.l.b16 %v75
  %v209 = vunpack.c.l.b16 %v76
  %v210 = vunpack.c.l.b16 %v77
  %v211 = vunpack.c.l.b16 %v78
  %v212 = vunpack.c.l.b16 %v79
  %v213 = vunpack.c.l.b16 %v80
  %v214 = vunpack.c.l.b16 %v81
  %v215 = vpack.c.b16 %v152, %v151
  %v216 = vpack.c.b16 %v154, %v153
  %v217 = vpack.c.b16 %v156, %v155
  %v218 = vpack.c.b16 %v158, %v157
  %v219 = vpack.c.b16 %v160, %v159
  %v220 = vpack.c.b16 %v162, %v161
  %v221 = vpack.c.b16 %v164, %v163
  %v222 = vpack.c.b16 %v166, %v165
  %v223 = vpack.c.b16 %v168, %v167
  %v224 = vpack.c.b16 %v170, %v169
  %v225 = vpack.c.b16 %v172, %v171
  %v226 = vpack.c.b16 %v174, %v173
  %v227 = vpack.c.b16 %v176, %v175
  %v228 = vpack.c.b16 %v178, %v177
  %v229 = vpack.c.b16 %v180, %v179
  %v230 = vpack.c.b16 %v182, %v181
  %v231 = vpack.c.b16 %v184, %v183
  %v232 = vpack.c.b16 %v186, %v185
  %v233 = vpack.c.b16 %v188, %v187
  %v234 = vpack.c.b16 %v190, %v189
  %v235 = vpack.c.b16 %v192, %v191
  %v236 = vpack.c.b16 %v194, %v193
  %v237 = vpack.c.b16 %v196, %v195
  %v238 = vpack.c.b16 %v198, %v197
  %v239 = vpack.c.b16 %v200, %v199
  %v240 = vpack.c.b16 %v202, %v201
  %v241 = vpack.c.b16 %v204, %v203
  %v242 = vpack.c.b16 %v206, %v205
  %v243 = vpack.c.b16 %v208, %v207
  %v244 = vpack.c.b16 %v210, %v209
  %v245 = vpack.c.b16 %v212, %v211
  %v246 = vpack.c.b16 %v214, %v213
  %v252 = vunpack.c.l.b16 %v82
  %v253 = vunpack.c.l.b16 %v83
  %v254 = vunpack.c.l.b16 %v84
  %v255 = vunpack.c.l.b16 %v85
  %v256 = vunpack.c.l.b16 %v86
  %v257 = vpack.c.b16 %v253, %v252
  %v258 = vpack.c.b16 %v255, %v254
  %v259 = vpack.c.b16 %v256, %v256
  %vm262 = vcmask 293888
  %v264 = vsel %vm262, %v215, 0
  %v267 = vsel %vm262, %v216, 0
  %v270 = vsel %vm262, %v217, 0
  %v273 = vsel %vm262, %v218, 0
  %v276 = vsel %vm262, %v219, 0
  %v279 = vsel %vm262, %v220, 0
  %v282 = vsel %vm262, %v221, 0
  %v285 = vsel %vm262, %v222, 0
  %v288 = vsel %vm262, %v223, 0
  %v291 = vsel %vm262, %v224, 0
  %v294 = vsel %vm262, %v225, 0
  %v297 = vsel %vm262, %v226, 0
  %v300 = vsel %vm262, %v227, 0
  %v303 = vsel %vm262, %v228, 0
  %v306 = vsel %vm262, %v229, 0
  %v309 = vsel %vm262, %v230, 0
  %v312 = vsel %vm262, %v231, 0
  %v315 = vsel %vm262, %v232, 0
  %v318 = vsel %vm262, %v233, 0
  %v321 = vsel %vm262, %v234, 0
  %v324 = vsel %vm262, %v235, 0
  %v327 = vsel %vm262, %v236, 0
  %v330 = vsel %vm262, %v237, 0
  %v333 = vsel %vm262, %v238, 0
  %v336 = vsel %vm262, %v239, 0
  %v339 = vsel %vm262, %v240, 0
  %v342 = vsel %vm262, %v241, 0
  %v345 = vsel %vm262, %v242, 0
  %v348 = vsel %vm262, %v243, 0
  %v351 = vsel %vm262, %v244, 0
  %v354 = vsel %vm262, %v245, 0
  %v357 = vsel %vm262, %v246, 0
  %vm359 = vcmask 1041408
  %v361 = vsel %vm359, %v259, 0
  %363 = vmatprep.subr.bf16.mxu0 0
  %364 = vmatpush1.bf16.msra.mxu0 %v257
  %365 = vmatprep.subr.bf16.mxu0 0
  %366 = vmatpush1.bf16.msra.mxu0 %v258
  %367 = vmatprep.subr.bf16.mxu0 0
  %368 = vmatpush1.bf16.msra.mxu0 %v361
  %369 = vmatprep.subr.bf16.mxu0 0
  %370 = vmatpush1.bf16.msra.mxu0 0
  %371 = vmatprep.subr.bf16.mxu0 0
  %372 = vmatpush1.bf16.msra.mxu0 0
  %373 = vmatprep.subr.bf16.mxu0 0
  %374 = vmatpush1.bf16.msra.mxu0 0
  %375 = vmatprep.subr.bf16.mxu0 0
  %376 = vmatpush1.bf16.msra.mxu0 0
  %377 = vmatprep.subr.bf16.mxu0 0
  %378 = vmatpush1.bf16.msra.mxu0 0
  %379 = vmatprep.subr.bf16.mxu0 0
  %380 = vmatpush1.bf16.msra.mxu0 0
  %381 = vmatprep.subr.bf16.mxu0 0
  %382 = vmatpush1.bf16.msra.mxu0 0
  %383 = vmatprep.subr.bf16.mxu0 0
  %384 = vmatpush1.bf16.msra.mxu0 0
  %385 = vmatprep.subr.bf16.mxu0 0
  %386 = vmatpush1.bf16.msra.mxu0 0
  %387 = vmatprep.subr.bf16.mxu0 0
  %388 = vmatpush1.bf16.msra.mxu0 0
  %389 = vmatprep.subr.bf16.mxu0 0
  %390 = vmatpush1.bf16.msra.mxu0 0
  %391 = vmatprep.subr.bf16.mxu0 0
  %392 = vmatpush1.bf16.msra.mxu0 0
  %393 = vmatprep.subr.bf16.mxu0 0
  %394 = vmatpush1.bf16.msra.mxu0 0
  %395 = vmatprep.mubr.bf16.mxu0 0
  %396 = vmatmul.mubr.bf16.gmra.mrb[0].mxu0 %v264
  %v397 = vpop.f32.mrb[0].mxu0
  %v398 = vadd.f32 0.0, %v397
  %v399 = vpop.f32.mrb[0].mxu0
  %v400 = vpop.f32.mrb[0].mxu0
  %v401 = vadd.f32 0.0, %v400
  %v402 = vpop.f32.mrb[0].mxu0
  %403 = vmatprep.mubr.bf16.mxu0 0
  %404 = vmatmul.mubr.bf16.gmra.mrb[0].mxu0 %v267
  %v405 = vpop.f32.mrb[0].mxu0
  %v406 = vadd.f32 0.0, %v405
  %v407 = vpop.f32.mrb[0].mxu0
  %v408 = vpop.f32.mrb[0].mxu0
  %v409 = vadd.f32 0.0, %v408
  %v410 = vpop.f32.mrb[0].mxu0
  %411 = vmatprep.mubr.bf16.mxu0 0
  %412 = vmatmul.mubr.bf16.gmra.mrb[0].mxu0 %v270
  %v413 = vpop.f32.mrb[0].mxu0
  %v414 = vadd.f32 0.0, %v413
  %v415 = vpop.f32.mrb[0].mxu0
  %v416 = vpop.f32.mrb[0].mxu0
  %v417 = vadd.f32 0.0, %v416
  %v418 = vpop.f32.mrb[0].mxu0
  %419 = vmatprep.mubr.bf16.mxu0 0
  %420 = vmatmul.mubr.bf16.gmra.mrb[0].mxu0 %v273
  %v421 = vpop.f32.mrb[0].mxu0
  %v422 = vadd.f32 0.0, %v421
  %v423 = vpop.f32.mrb[0].mxu0
  %v424 = vpop.f32.mrb[0].mxu0
  %v425 = vadd.f32 0.0, %v424
  %v426 = vpop.f32.mrb[0].mxu0
  %427 = vmatprep.mubr.bf16.mxu0 0
  %428 = vmatmul.mubr.bf16.gmra.mrb[0].mxu0 %v276
  %v429 = vpop.f32.mrb[0].mxu0
  %v430 = vadd.f32 0.0, %v429
  %v431 = vpop.f32.mrb[0].mxu0
  %v432 = vpop.f32.mrb[0].mxu0
  %v433 = vadd.f32 0.0, %v432
  %v434 = vpop.f32.mrb[0].mxu0
  %435 = vmatprep.mubr.bf16.mxu0 0
  %436 = vmatmul.mubr.bf16.gmra.mrb[0].mxu0 %v279
  %v437 = vpop.f32.mrb[0].mxu0
  %v438 = vadd.f32 0.0, %v437
  %v439 = vpop.f32.mrb[0].mxu0
  %v440 = vpop.f32.mrb[0].mxu0
  %v441 = vadd.f32 0.0, %v440
  %v442 = vpop.f32.mrb[0].mxu0
  %443 = vmatprep.mubr.bf16.mxu0 0
  %444 = vmatmul.mubr.bf16.gmra.mrb[0].mxu0 %v282
  %v445 = vpop.f32.mrb[0].mxu0
  %v446 = vadd.f32 0.0, %v445
  %v447 = vpop.f32.mrb[0].mxu0
  %v448 = vpop.f32.mrb[0].mxu0
  %v449 = vadd.f32 0.0, %v448
  %v450 = vpop.f32.mrb[0].mxu0
  %451 = vmatprep.mubr.bf16.mxu0 0
  %452 = vmatmul.mubr.bf16.gmra.mrb[0].mxu0 %v285
  %v453 = vpop.f32.mrb[0].mxu0
  %v454 = vadd.f32 0.0, %v453
  %v455 = vpop.f32.mrb[0].mxu0
  %v456 = vpop.f32.mrb[0].mxu0
  %v457 = vadd.f32 0.0, %v456
  %v458 = vpop.f32.mrb[0].mxu0
  %459 = vmatprep.mubr.bf16.mxu0 0
  %460 = vmatmul.mubr.bf16.gmra.mrb[0].mxu0 %v288
  %v461 = vpop.f32.mrb[0].mxu0
  %v462 = vadd.f32 0.0, %v461
  %v463 = vpop.f32.mrb[0].mxu0
  %v464 = vpop.f32.mrb[0].mxu0
  %v465 = vadd.f32 0.0, %v464
  %v466 = vpop.f32.mrb[0].mxu0
  %467 = vmatprep.mubr.bf16.mxu0 0
  %468 = vmatmul.mubr.bf16.gmra.mrb[0].mxu0 %v291
  %v469 = vpop.f32.mrb[0].mxu0
  %v470 = vadd.f32 0.0, %v469
  %v471 = vpop.f32.mrb[0].mxu0
  %v472 = vpop.f32.mrb[0].mxu0
  %v473 = vadd.f32 0.0, %v472
  %v474 = vpop.f32.mrb[0].mxu0
  %475 = vmatprep.mubr.bf16.mxu0 0
  %476 = vmatmul.mubr.bf16.gmra.mrb[0].mxu0 %v294
  %v477 = vpop.f32.mrb[0].mxu0
  %v478 = vadd.f32 0.0, %v477
  %v479 = vpop.f32.mrb[0].mxu0
  %v480 = vpop.f32.mrb[0].mxu0
  %v481 = vadd.f32 0.0, %v480
  %v482 = vpop.f32.mrb[0].mxu0
  %483 = vmatprep.mubr.bf16.mxu0 0
  %484 = vmatmul.mubr.bf16.gmra.mrb[0].mxu0 %v297
  %v485 = vpop.f32.mrb[0].mxu0
  %v486 = vadd.f32 0.0, %v485
  %v487 = vpop.f32.mrb[0].mxu0
  %v488 = vpop.f32.mrb[0].mxu0
  %v489 = vadd.f32 0.0, %v488
  %v490 = vpop.f32.mrb[0].mxu0
  %491 = vmatprep.mubr.bf16.mxu0 0
  %492 = vmatmul.mubr.bf16.gmra.mrb[0].mxu0 %v300
  %v493 = vpop.f32.mrb[0].mxu0
  %v494 = vadd.f32 0.0, %v493
  %v495 = vpop.f32.mrb[0].mxu0
  %v496 = vpop.f32.mrb[0].mxu0
  %v497 = vadd.f32 0.0, %v496
  %v498 = vpop.f32.mrb[0].mxu0
  %499 = vmatprep.mubr.bf16.mxu0 0
  %500 = vmatmul.mubr.bf16.gmra.mrb[0].mxu0 %v303
  %v501 = vpop.f32.mrb[0].mxu0
  %v502 = vadd.f32 0.0, %v501
  %v503 = vpop.f32.mrb[0].mxu0
  %v504 = vpop.f32.mrb[0].mxu0
  %v505 = vadd.f32 0.0, %v504
  %v506 = vpop.f32.mrb[0].mxu0
  %507 = vmatprep.mubr.bf16.mxu0 0
  %508 = vmatmul.mubr.bf16.gmra.mrb[0].mxu0 %v306
  %v509 = vpop.f32.mrb[0].mxu0
  %v510 = vadd.f32 0.0, %v509
  %v511 = vpop.f32.mrb[0].mxu0
  %v512 = vpop.f32.mrb[0].mxu0
  %v513 = vadd.f32 0.0, %v512
  %v514 = vpop.f32.mrb[0].mxu0
  %515 = vmatprep.mubr.bf16.mxu0 0
  %516 = vmatmul.mubr.bf16.gmra.mrb[0].mxu0 %v309
  %v517 = vpop.f32.mrb[0].mxu0
  %v518 = vadd.f32 0.0, %v517
  %v519 = vpop.f32.mrb[0].mxu0
  %v520 = vpop.f32.mrb[0].mxu0
  %v521 = vadd.f32 0.0, %v520
  %v522 = vpop.f32.mrb[0].mxu0
  %523 = vmatprep.mubr.bf16.mxu0 0
  %524 = vmatmul.mubr.bf16.gmra.mrb[0].mxu0 %v312
  %v525 = vpop.f32.mrb[0].mxu0
  %v526 = vadd.f32 0.0, %v525
  %v527 = vpop.f32.mrb[0].mxu0
  %v528 = vpop.f32.mrb[0].mxu0
  %v529 = vadd.f32 0.0, %v528
  %v530 = vpop.f32.mrb[0].mxu0
  %531 = vmatprep.mubr.bf16.mxu0 0
  %532 = vmatmul.mubr.bf16.gmra.mrb[0].mxu0 %v315
  %v533 = vpop.f32.mrb[0].mxu0
  %v534 = vadd.f32 0.0, %v533
  %v535 = vpop.f32.mrb[0].mxu0
  %v536 = vpop.f32.mrb[0].mxu0
  %v537 = vadd.f32 0.0, %v536
  %v538 = vpop.f32.mrb[0].mxu0
  %539 = vmatprep.mubr.bf16.mxu0 0
  %540 = vmatmul.mubr.bf16.gmra.mrb[0].mxu0 %v318
  %v541 = vpop.f32.mrb[0].mxu0
  %v542 = vadd.f32 0.0, %v541
  %v543 = vpop.f32.mrb[0].mxu0
  %v544 = vpop.f32.mrb[0].mxu0
  %v545 = vadd.f32 0.0, %v544
  %v546 = vpop.f32.mrb[0].mxu0
  %547 = vmatprep.mubr.bf16.mxu0 0
  %548 = vmatmul.mubr.bf16.gmra.mrb[0].mxu0 %v321
  %v549 = vpop.f32.mrb[0].mxu0
  %v550 = vadd.f32 0.0, %v549
  %v551 = vpop.f32.mrb[0].mxu0
  %v552 = vpop.f32.mrb[0].mxu0
  %v553 = vadd.f32 0.0, %v552
  %v554 = vpop.f32.mrb[0].mxu0
  %555 = vmatprep.mubr.bf16.mxu0 0
  %556 = vmatmul.mubr.bf16.gmra.mrb[0].mxu0 %v324
  %v557 = vpop.f32.mrb[0].mxu0
  %v558 = vadd.f32 0.0, %v557
  %v559 = vpop.f32.mrb[0].mxu0
  %v560 = vpop.f32.mrb[0].mxu0
  %v561 = vadd.f32 0.0, %v560
  %v562 = vpop.f32.mrb[0].mxu0
  %563 = vmatprep.mubr.bf16.mxu0 0
  %564 = vmatmul.mubr.bf16.gmra.mrb[0].mxu0 %v327
  %v565 = vpop.f32.mrb[0].mxu0
  %v566 = vadd.f32 0.0, %v565
  %v567 = vpop.f32.mrb[0].mxu0
  %v568 = vpop.f32.mrb[0].mxu0
  %v569 = vadd.f32 0.0, %v568
  %v570 = vpop.f32.mrb[0].mxu0
  %571 = vmatprep.mubr.bf16.mxu0 0
  %572 = vmatmul.mubr.bf16.gmra.mrb[0].mxu0 %v330
  %v573 = vpop.f32.mrb[0].mxu0
  %v574 = vadd.f32 0.0, %v573
  %v575 = vpop.f32.mrb[0].mxu0
  %v576 = vpop.f32.mrb[0].mxu0
  %v577 = vadd.f32 0.0, %v576
  %v578 = vpop.f32.mrb[0].mxu0
  %579 = vmatprep.mubr.bf16.mxu0 0
  %580 = vmatmul.mubr.bf16.gmra.mrb[0].mxu0 %v333
  %v581 = vpop.f32.mrb[0].mxu0
  %v582 = vadd.f32 0.0, %v581
  %v583 = vpop.f32.mrb[0].mxu0
  %v584 = vpop.f32.mrb[0].mxu0
  %v585 = vadd.f32 0.0, %v584
  %v586 = vpop.f32.mrb[0].mxu0
  %587 = vmatprep.mubr.bf16.mxu0 0
  %588 = vmatmul.mubr.bf16.gmra.mrb[0].mxu0 %v336
  %v589 = vpop.f32.mrb[0].mxu0
  %v590 = vadd.f32 0.0, %v589
  %v591 = vpop.f32.mrb[0].mxu0
  %v592 = vpop.f32.mrb[0].mxu0
  %v593 = vadd.f32 0.0, %v592
  %v594 = vpop.f32.mrb[0].mxu0
  %595 = vmatprep.mubr.bf16.mxu0 0
  %596 = vmatmul.mubr.bf16.gmra.mrb[0].mxu0 %v339
  %v597 = vpop.f32.mrb[0].mxu0
  %v598 = vadd.f32 0.0, %v597
  %v599 = vpop.f32.mrb[0].mxu0
  %v600 = vpop.f32.mrb[0].mxu0
  %v601 = vadd.f32 0.0, %v600
  %v602 = vpop.f32.mrb[0].mxu0
  %603 = vmatprep.mubr.bf16.mxu0 0
  %604 = vmatmul.mubr.bf16.gmra.mrb[0].mxu0 %v342
  %v605 = vpop.f32.mrb[0].mxu0
  %v606 = vadd.f32 0.0, %v605
  %v607 = vpop.f32.mrb[0].mxu0
  %v608 = vpop.f32.mrb[0].mxu0
  %v609 = vadd.f32 0.0, %v608
  %v610 = vpop.f32.mrb[0].mxu0
  %611 = vmatprep.mubr.bf16.mxu0 0
  %612 = vmatmul.mubr.bf16.gmra.mrb[0].mxu0 %v345
  %v613 = vpop.f32.mrb[0].mxu0
  %v614 = vadd.f32 0.0, %v613
  %v615 = vpop.f32.mrb[0].mxu0
  %v616 = vpop.f32.mrb[0].mxu0
  %v617 = vadd.f32 0.0, %v616
  %v618 = vpop.f32.mrb[0].mxu0
  %619 = vmatprep.mubr.bf16.mxu0 0
  %620 = vmatmul.mubr.bf16.gmra.mrb[0].mxu0 %v348
  %v621 = vpop.f32.mrb[0].mxu0
  %v622 = vadd.f32 0.0, %v621
  %v623 = vpop.f32.mrb[0].mxu0
  %v624 = vpop.f32.mrb[0].mxu0
  %v625 = vadd.f32 0.0, %v624
  %v626 = vpop.f32.mrb[0].mxu0
  %627 = vmatprep.mubr.bf16.mxu0 0
  %628 = vmatmul.mubr.bf16.gmra.mrb[0].mxu0 %v351
  %v629 = vpop.f32.mrb[0].mxu0
  %v630 = vadd.f32 0.0, %v629
  %v631 = vpop.f32.mrb[0].mxu0
  %v632 = vpop.f32.mrb[0].mxu0
  %v633 = vadd.f32 0.0, %v632
  %v634 = vpop.f32.mrb[0].mxu0
  %635 = vmatprep.mubr.bf16.mxu0 0
  %636 = vmatmul.mubr.bf16.gmra.mrb[0].mxu0 %v354
  %v637 = vpop.f32.mrb[0].mxu0
  %v638 = vadd.f32 0.0, %v637
  %v639 = vpop.f32.mrb[0].mxu0
  %v640 = vpop.f32.mrb[0].mxu0
  %v641 = vadd.f32 0.0, %v640
  %v642 = vpop.f32.mrb[0].mxu0
  %643 = vmatprep.mubr.bf16.mxu0 0
  %644 = vmatmul.mubr.bf16.gmra.mrb[0].mxu0 %v357
  %v645 = vpop.f32.mrb[0].mxu0
  %v646 = vadd.f32 0.0, %v645
  %v647 = vpop.f32.mrb[0].mxu0
  %v648 = vpop.f32.mrb[0].mxu0
  %v649 = vadd.f32 0.0, %v648
  %v650 = vpop.f32.mrb[0].mxu0
  %651 = vdwg.mxu0
  %vm652 = vcmask 64512
  %v653 = vsel %vm652, %v398, 0.0
  %v654 = vsel %vm652, %v401, 0.0
  %v655 = vadd.f32 %v653, %v654
  %v656 = vsel %vm652, %v406, 0.0
  %v657 = vadd.f32 %v655, %v656
  %v658 = vsel %vm652, %v409, 0.0
  %v659 = vadd.f32 %v657, %v658
  %v660 = vsel %vm652, %v414, 0.0
  %v661 = vadd.f32 %v659, %v660
  %v662 = vsel %vm652, %v417, 0.0
  %v663 = vadd.f32 %v661, %v662
  %v664 = vsel %vm652, %v422, 0.0
  %v665 = vadd.f32 %v663, %v664
  %v666 = vsel %vm652, %v425, 0.0
  %v667 = vadd.f32 %v665, %v666
  %v668 = vsel %vm652, %v430, 0.0
  %v669 = vadd.f32 %v667, %v668
  %v670 = vsel %vm652, %v433, 0.0
  %v671 = vadd.f32 %v669, %v670
  %v672 = vsel %vm652, %v438, 0.0
  %v673 = vadd.f32 %v671, %v672
  %v674 = vsel %vm652, %v441, 0.0
  %v675 = vadd.f32 %v673, %v674
  %v676 = vsel %vm652, %v446, 0.0
  %v677 = vadd.f32 %v675, %v676
  %v678 = vsel %vm652, %v449, 0.0
  %v679 = vadd.f32 %v677, %v678
  %v680 = vsel %vm652, %v454, 0.0
  %v681 = vadd.f32 %v679, %v680
  %v682 = vsel %vm652, %v457, 0.0
  %v683 = vadd.f32 %v681, %v682
  %v684 = vsel %vm652, %v462, 0.0
  %v685 = vadd.f32 %v683, %v684
  %v686 = vsel %vm652, %v465, 0.0
  %v687 = vadd.f32 %v685, %v686
  %v688 = vsel %vm652, %v470, 0.0
  %v689 = vadd.f32 %v687, %v688
  %v690 = vsel %vm652, %v473, 0.0
  %v691 = vadd.f32 %v689, %v690
  %v692 = vsel %vm652, %v478, 0.0
  %v693 = vadd.f32 %v691, %v692
  %v694 = vsel %vm652, %v481, 0.0
  %v695 = vadd.f32 %v693, %v694
  %v696 = vsel %vm652, %v486, 0.0
  %v697 = vadd.f32 %v695, %v696
  %v698 = vsel %vm652, %v489, 0.0
  %v699 = vadd.f32 %v697, %v698
  %v700 = vsel %vm652, %v494, 0.0
  %v701 = vadd.f32 %v699, %v700
  %v702 = vsel %vm652, %v497, 0.0
  %v703 = vadd.f32 %v701, %v702
  %v704 = vsel %vm652, %v502, 0.0
  %v705 = vadd.f32 %v703, %v704
  %v706 = vsel %vm652, %v505, 0.0
  %v707 = vadd.f32 %v705, %v706
  %v708 = vsel %vm652, %v510, 0.0
  %v709 = vadd.f32 %v707, %v708
  %v710 = vsel %vm652, %v513, 0.0
  %v711 = vadd.f32 %v709, %v710
  %v712 = vsel %vm652, %v518, 0.0
  %v713 = vadd.f32 %v711, %v712
  %v714 = vsel %vm652, %v521, 0.0
  %v715 = vadd.f32 %v713, %v714
  %v716 = vsel %vm652, %v526, 0.0
  %v717 = vadd.f32 %v715, %v716
  %v718 = vsel %vm652, %v529, 0.0
  %v719 = vadd.f32 %v717, %v718
  %v720 = vsel %vm652, %v534, 0.0
  %v721 = vadd.f32 %v719, %v720
  %v722 = vsel %vm652, %v537, 0.0
  %v723 = vadd.f32 %v721, %v722
  %v724 = vsel %vm652, %v542, 0.0
  %v725 = vadd.f32 %v723, %v724
  %v726 = vsel %vm652, %v545, 0.0
  %v727 = vadd.f32 %v725, %v726
  %v728 = vsel %vm652, %v550, 0.0
  %v729 = vadd.f32 %v727, %v728
  %v730 = vsel %vm652, %v553, 0.0
  %v731 = vadd.f32 %v729, %v730
  %v732 = vsel %vm652, %v558, 0.0
  %v733 = vadd.f32 %v731, %v732
  %v734 = vsel %vm652, %v561, 0.0
  %v735 = vadd.f32 %v733, %v734
  %v736 = vsel %vm652, %v566, 0.0
  %v737 = vadd.f32 %v735, %v736
  %v738 = vsel %vm652, %v569, 0.0
  %v739 = vadd.f32 %v737, %v738
  %v740 = vsel %vm652, %v574, 0.0
  %v741 = vadd.f32 %v739, %v740
  %v742 = vsel %vm652, %v577, 0.0
  %v743 = vadd.f32 %v741, %v742
  %v744 = vsel %vm652, %v582, 0.0
  %v745 = vadd.f32 %v743, %v744
  %v746 = vsel %vm652, %v585, 0.0
  %v747 = vadd.f32 %v745, %v746
  %v748 = vsel %vm652, %v590, 0.0
  %v749 = vadd.f32 %v747, %v748
  %v750 = vsel %vm652, %v593, 0.0
  %v751 = vadd.f32 %v749, %v750
  %v752 = vsel %vm652, %v598, 0.0
  %v753 = vadd.f32 %v751, %v752
  %v754 = vsel %vm652, %v601, 0.0
  %v755 = vadd.f32 %v753, %v754
  %v756 = vsel %vm652, %v606, 0.0
  %v757 = vadd.f32 %v755, %v756
  %v758 = vsel %vm652, %v609, 0.0
  %v759 = vadd.f32 %v757, %v758
  %v760 = vsel %vm652, %v614, 0.0
  %v761 = vadd.f32 %v759, %v760
  %v762 = vsel %vm652, %v617, 0.0
  %v763 = vadd.f32 %v761, %v762
  %v764 = vsel %vm652, %v622, 0.0
  %v765 = vadd.f32 %v763, %v764
  %v766 = vsel %vm652, %v625, 0.0
  %v767 = vadd.f32 %v765, %v766
  %v768 = vsel %vm652, %v630, 0.0
  %v769 = vadd.f32 %v767, %v768
  %v770 = vsel %vm652, %v633, 0.0
  %v771 = vadd.f32 %v769, %v770
  %v772 = vsel %vm652, %v638, 0.0
  %v773 = vadd.f32 %v771, %v772
  %v774 = vsel %vm652, %v641, 0.0
  %v775 = vadd.f32 %v773, %v774
  %v776 = vsel %vm652, %v646, 0.0
  %v777 = vadd.f32 %v775, %v776
  %v778 = vsel %vm652, %v649, 0.0
  %v779 = vadd.f32 %v777, %v778
  %v780 = vrot.slane %v779, 4
  %v781 = vadd.f32 %v779, %v780
  %v782 = vrot.slane %v781, 2
  %v783 = vadd.f32 %v781, %v782
  %v784 = vrot.slane %v783, 1
  %v785 = vadd.f32 %v783, %v784
  %v786 = vmul.f32 %v398, %v398
  %v787 = vmul.f32 %v401, %v401
  %v788 = vmul.f32 %v406, %v406
  %v789 = vmul.f32 %v409, %v409
  %v790 = vmul.f32 %v414, %v414
  %v791 = vmul.f32 %v417, %v417
  %v792 = vmul.f32 %v422, %v422
  %v793 = vmul.f32 %v425, %v425
  %v794 = vmul.f32 %v430, %v430
  %v795 = vmul.f32 %v433, %v433
  %v796 = vmul.f32 %v438, %v438
  %v797 = vmul.f32 %v441, %v441
  %v798 = vmul.f32 %v446, %v446
  %v799 = vmul.f32 %v449, %v449
  %v800 = vmul.f32 %v454, %v454
  %v801 = vmul.f32 %v457, %v457
  %v802 = vmul.f32 %v462, %v462
  %v803 = vmul.f32 %v465, %v465
  %v804 = vmul.f32 %v470, %v470
  %v805 = vmul.f32 %v473, %v473
  %v806 = vmul.f32 %v478, %v478
  %v807 = vmul.f32 %v481, %v481
  %v808 = vmul.f32 %v486, %v486
  %v809 = vmul.f32 %v489, %v489
  %v810 = vmul.f32 %v494, %v494
  %v811 = vmul.f32 %v497, %v497
  %v812 = vmul.f32 %v502, %v502
  %v813 = vmul.f32 %v505, %v505
  %v814 = vmul.f32 %v510, %v510
  %v815 = vmul.f32 %v513, %v513
  %v816 = vmul.f32 %v518, %v518
  %v817 = vmul.f32 %v521, %v521
  %v818 = vmul.f32 %v526, %v526
  %v819 = vmul.f32 %v529, %v529
  %v820 = vmul.f32 %v534, %v534
  %v821 = vmul.f32 %v537, %v537
  %v822 = vmul.f32 %v542, %v542
  %v823 = vmul.f32 %v545, %v545
  %v824 = vmul.f32 %v550, %v550
  %v825 = vmul.f32 %v553, %v553
  %v826 = vmul.f32 %v558, %v558
  %v827 = vmul.f32 %v561, %v561
  %v828 = vmul.f32 %v566, %v566
  %v829 = vmul.f32 %v569, %v569
  %v830 = vmul.f32 %v574, %v574
  %v831 = vmul.f32 %v577, %v577
  %v832 = vmul.f32 %v582, %v582
  %v833 = vmul.f32 %v585, %v585
  %v834 = vmul.f32 %v590, %v590
  %v835 = vmul.f32 %v593, %v593
  %v836 = vmul.f32 %v598, %v598
  %v837 = vmul.f32 %v601, %v601
  %v838 = vmul.f32 %v606, %v606
  %v839 = vmul.f32 %v609, %v609
  %v840 = vmul.f32 %v614, %v614
  %v841 = vmul.f32 %v617, %v617
  %v842 = vmul.f32 %v622, %v622
  %v843 = vmul.f32 %v625, %v625
  %v844 = vmul.f32 %v630, %v630
  %v845 = vmul.f32 %v633, %v633
  %v846 = vmul.f32 %v638, %v638
  %v847 = vmul.f32 %v641, %v641
  %v848 = vmul.f32 %v646, %v646
  %v849 = vmul.f32 %v649, %v649
  %v850 = vsel %vm652, %v786, 0.0
  %v851 = vsel %vm652, %v787, 0.0
  %v852 = vadd.f32 %v850, %v851
  %v853 = vsel %vm652, %v788, 0.0
  %v854 = vadd.f32 %v852, %v853
  %v855 = vsel %vm652, %v789, 0.0
  %v856 = vadd.f32 %v854, %v855
  %v857 = vsel %vm652, %v790, 0.0
  %v858 = vadd.f32 %v856, %v857
  %v859 = vsel %vm652, %v791, 0.0
  %v860 = vadd.f32 %v858, %v859
  %v861 = vsel %vm652, %v792, 0.0
  %v862 = vadd.f32 %v860, %v861
  %v863 = vsel %vm652, %v793, 0.0
  %v864 = vadd.f32 %v862, %v863
  %v865 = vsel %vm652, %v794, 0.0
  %v866 = vadd.f32 %v864, %v865
  %v867 = vsel %vm652, %v795, 0.0
  %v868 = vadd.f32 %v866, %v867
  %v869 = vsel %vm652, %v796, 0.0
  %v870 = vadd.f32 %v868, %v869
  %v871 = vsel %vm652, %v797, 0.0
  %v872 = vadd.f32 %v870, %v871
  %v873 = vsel %vm652, %v798, 0.0
  %v874 = vadd.f32 %v872, %v873
  %v875 = vsel %vm652, %v799, 0.0
  %v876 = vadd.f32 %v874, %v875
  %v877 = vsel %vm652, %v800, 0.0
  %v878 = vadd.f32 %v876, %v877
  %v879 = vsel %vm652, %v801, 0.0
  %v880 = vadd.f32 %v878, %v879
  %v881 = vsel %vm652, %v802, 0.0
  %v882 = vadd.f32 %v880, %v881
  %v883 = vsel %vm652, %v803, 0.0
  %v884 = vadd.f32 %v882, %v883
  %v885 = vsel %vm652, %v804, 0.0
  %v886 = vadd.f32 %v884, %v885
  %v887 = vsel %vm652, %v805, 0.0
  %v888 = vadd.f32 %v886, %v887
  %v889 = vsel %vm652, %v806, 0.0
  %v890 = vadd.f32 %v888, %v889
  %v891 = vsel %vm652, %v807, 0.0
  %v892 = vadd.f32 %v890, %v891
  %v893 = vsel %vm652, %v808, 0.0
  %v894 = vadd.f32 %v892, %v893
  %v895 = vsel %vm652, %v809, 0.0
  %v896 = vadd.f32 %v894, %v895
  %v897 = vsel %vm652, %v810, 0.0
  %v898 = vadd.f32 %v896, %v897
  %v899 = vsel %vm652, %v811, 0.0
  %v900 = vadd.f32 %v898, %v899
  %v901 = vsel %vm652, %v812, 0.0
  %v902 = vadd.f32 %v900, %v901
  %v903 = vsel %vm652, %v813, 0.0
  %v904 = vadd.f32 %v902, %v903
  %v905 = vsel %vm652, %v814, 0.0
  %v906 = vadd.f32 %v904, %v905
  %v907 = vsel %vm652, %v815, 0.0
  %v908 = vadd.f32 %v906, %v907
  %v909 = vsel %vm652, %v816, 0.0
  %v910 = vadd.f32 %v908, %v909
  %v911 = vsel %vm652, %v817, 0.0
  %v912 = vadd.f32 %v910, %v911
  %v913 = vsel %vm652, %v818, 0.0
  %v914 = vadd.f32 %v912, %v913
  %v915 = vsel %vm652, %v819, 0.0
  %v916 = vadd.f32 %v914, %v915
  %v917 = vsel %vm652, %v820, 0.0
  %v918 = vadd.f32 %v916, %v917
  %v919 = vsel %vm652, %v821, 0.0
  %v920 = vadd.f32 %v918, %v919
  %v921 = vsel %vm652, %v822, 0.0
  %v922 = vadd.f32 %v920, %v921
  %v923 = vsel %vm652, %v823, 0.0
  %v924 = vadd.f32 %v922, %v923
  %v925 = vsel %vm652, %v824, 0.0
  %v926 = vadd.f32 %v924, %v925
  %v927 = vsel %vm652, %v825, 0.0
  %v928 = vadd.f32 %v926, %v927
  %v929 = vsel %vm652, %v826, 0.0
  %v930 = vadd.f32 %v928, %v929
  %v931 = vsel %vm652, %v827, 0.0
  %v932 = vadd.f32 %v930, %v931
  %v933 = vsel %vm652, %v828, 0.0
  %v934 = vadd.f32 %v932, %v933
  %v935 = vsel %vm652, %v829, 0.0
  %v936 = vadd.f32 %v934, %v935
  %v937 = vsel %vm652, %v830, 0.0
  %v938 = vadd.f32 %v936, %v937
  %v939 = vsel %vm652, %v831, 0.0
  %v940 = vadd.f32 %v938, %v939
  %v941 = vsel %vm652, %v832, 0.0
  %v942 = vadd.f32 %v940, %v941
  %v943 = vsel %vm652, %v833, 0.0
  %v944 = vadd.f32 %v942, %v943
  %v945 = vsel %vm652, %v834, 0.0
  %v946 = vadd.f32 %v944, %v945
  %v947 = vsel %vm652, %v835, 0.0
  %v948 = vadd.f32 %v946, %v947
  %v949 = vsel %vm652, %v836, 0.0
  %v950 = vadd.f32 %v948, %v949
  %v951 = vsel %vm652, %v837, 0.0
  %v952 = vadd.f32 %v950, %v951
  %v953 = vsel %vm652, %v838, 0.0
  %v954 = vadd.f32 %v952, %v953
  %v955 = vsel %vm652, %v839, 0.0
  %v956 = vadd.f32 %v954, %v955
  %v957 = vsel %vm652, %v840, 0.0
  %v958 = vadd.f32 %v956, %v957
  %v959 = vsel %vm652, %v841, 0.0
  %v960 = vadd.f32 %v958, %v959
  %v961 = vsel %vm652, %v842, 0.0
  %v962 = vadd.f32 %v960, %v961
  %v963 = vsel %vm652, %v843, 0.0
  %v964 = vadd.f32 %v962, %v963
  %v965 = vsel %vm652, %v844, 0.0
  %v966 = vadd.f32 %v964, %v965
  %v967 = vsel %vm652, %v845, 0.0
  %v968 = vadd.f32 %v966, %v967
  %v969 = vsel %vm652, %v846, 0.0
  %v970 = vadd.f32 %v968, %v969
  %v971 = vsel %vm652, %v847, 0.0
  %v972 = vadd.f32 %v970, %v971
  %v973 = vsel %vm652, %v848, 0.0
  %v974 = vadd.f32 %v972, %v973
  %v975 = vsel %vm652, %v849, 0.0
  %v976 = vadd.f32 %v974, %v975
  %v977 = vrot.slane %v976, 4
  %v978 = vadd.f32 %v976, %v977
  %v979 = vrot.slane %v978, 2
  %v980 = vadd.f32 %v978, %v979
  %v981 = vrot.slane %v980, 1
  %v982 = vadd.f32 %v980, %v981
  %v983 = vmul.f32 %v785, 0.001953125
  %v984 = vmul.f32 %v982, 0.001953125
  %v985 = vmul.f32 %v983, %v983
  %v986 = vsub.f32 %v984, %v985
  %v987 = vadd.f32 %v986, 1e-05
  %v988 = vrsqrt.pop %v987
  %v989 = vld [vmem:[%s2] sm:$0x1]
  %v990 = vmul.f32 %v989, %v988
  %v991 = vld [vmem:[%s3] sm:$0x1]
  %v992 = vmul.f32 %v983, %v990
  %v993 = vsub.f32 %v991, %v992
  %v995 = vlaneseq
  %v996 = vshrl.u32 %v995, 7
  %v997 = vsub.s32 0, %v996
  %v998 = vrot.slane %v990, %v997
  %v1000 = vmul.f32 %v398, %v998
  %v1001 = vmul.f32 %v401, %v998
  %v1002 = vmul.f32 %v406, %v998
  %v1003 = vmul.f32 %v409, %v998
  %v1004 = vmul.f32 %v414, %v998
  %v1005 = vmul.f32 %v417, %v998
  %v1006 = vmul.f32 %v422, %v998
  %v1007 = vmul.f32 %v425, %v998
  %v1008 = vmul.f32 %v430, %v998
  %v1009 = vmul.f32 %v433, %v998
  %v1010 = vmul.f32 %v438, %v998
  %v1011 = vmul.f32 %v441, %v998
  %v1012 = vmul.f32 %v446, %v998
  %v1013 = vmul.f32 %v449, %v998
  %v1014 = vmul.f32 %v454, %v998
  %v1015 = vmul.f32 %v457, %v998
  %v1016 = vmul.f32 %v462, %v998
  %v1017 = vmul.f32 %v465, %v998
  %v1018 = vmul.f32 %v470, %v998
  %v1019 = vmul.f32 %v473, %v998
  %v1020 = vmul.f32 %v478, %v998
  %v1021 = vmul.f32 %v481, %v998
  %v1022 = vmul.f32 %v486, %v998
  %v1023 = vmul.f32 %v489, %v998
  %v1024 = vmul.f32 %v494, %v998
  %v1025 = vmul.f32 %v497, %v998
  %v1026 = vmul.f32 %v502, %v998
  %v1027 = vmul.f32 %v505, %v998
  %v1028 = vmul.f32 %v510, %v998
  %v1029 = vmul.f32 %v513, %v998
  %v1030 = vmul.f32 %v518, %v998
  %v1031 = vmul.f32 %v521, %v998
  %v1032 = vmul.f32 %v526, %v998
  %v1033 = vmul.f32 %v529, %v998
  %v1034 = vmul.f32 %v534, %v998
  %v1035 = vmul.f32 %v537, %v998
  %v1036 = vmul.f32 %v542, %v998
  %v1037 = vmul.f32 %v545, %v998
  %v1038 = vmul.f32 %v550, %v998
  %v1039 = vmul.f32 %v553, %v998
  %v1040 = vmul.f32 %v558, %v998
  %v1041 = vmul.f32 %v561, %v998
  %v1042 = vmul.f32 %v566, %v998
  %v1043 = vmul.f32 %v569, %v998
  %v1044 = vmul.f32 %v574, %v998
  %v1045 = vmul.f32 %v577, %v998
  %v1046 = vmul.f32 %v582, %v998
  %v1047 = vmul.f32 %v585, %v998
  %v1048 = vmul.f32 %v590, %v998
  %v1049 = vmul.f32 %v593, %v998
  %v1050 = vmul.f32 %v598, %v998
  %v1051 = vmul.f32 %v601, %v998
  %v1052 = vmul.f32 %v606, %v998
  %v1053 = vmul.f32 %v609, %v998
  %v1054 = vmul.f32 %v614, %v998
  %v1055 = vmul.f32 %v617, %v998
  %v1056 = vmul.f32 %v622, %v998
  %v1057 = vmul.f32 %v625, %v998
  %v1058 = vmul.f32 %v630, %v998
  %v1059 = vmul.f32 %v633, %v998
  %v1060 = vmul.f32 %v638, %v998
  %v1061 = vmul.f32 %v641, %v998
  %v1062 = vmul.f32 %v646, %v998
  %v1063 = vmul.f32 %v649, %v998
  %v1065 = vlaneseq
  %v1066 = vshrl.u32 %v1065, 7
  %v1067 = vsub.s32 0, %v1066
  %v1068 = vrot.slane %v993, %v1067
  %v1070 = vadd.f32 %v1000, %v1068
  %v1071 = vadd.f32 %v1001, %v1068
  %v1072 = vadd.f32 %v1002, %v1068
  %v1073 = vadd.f32 %v1003, %v1068
  %v1074 = vadd.f32 %v1004, %v1068
  %v1075 = vadd.f32 %v1005, %v1068
  %v1076 = vadd.f32 %v1006, %v1068
  %v1077 = vadd.f32 %v1007, %v1068
  %v1078 = vadd.f32 %v1008, %v1068
  %v1079 = vadd.f32 %v1009, %v1068
  %v1080 = vadd.f32 %v1010, %v1068
  %v1081 = vadd.f32 %v1011, %v1068
  %v1082 = vadd.f32 %v1012, %v1068
  %v1083 = vadd.f32 %v1013, %v1068
  %v1084 = vadd.f32 %v1014, %v1068
  %v1085 = vadd.f32 %v1015, %v1068
  %v1086 = vadd.f32 %v1016, %v1068
  %v1087 = vadd.f32 %v1017, %v1068
  %v1088 = vadd.f32 %v1018, %v1068
  %v1089 = vadd.f32 %v1019, %v1068
  %v1090 = vadd.f32 %v1020, %v1068
  %v1091 = vadd.f32 %v1021, %v1068
  %v1092 = vadd.f32 %v1022, %v1068
  %v1093 = vadd.f32 %v1023, %v1068
  %v1094 = vadd.f32 %v1024, %v1068
  %v1095 = vadd.f32 %v1025, %v1068
  %v1096 = vadd.f32 %v1026, %v1068
  %v1097 = vadd.f32 %v1027, %v1068
  %v1098 = vadd.f32 %v1028, %v1068
  %v1099 = vadd.f32 %v1029, %v1068
  %v1100 = vadd.f32 %v1030, %v1068
  %v1101 = vadd.f32 %v1031, %v1068
  %v1102 = vadd.f32 %v1032, %v1068
  %v1103 = vadd.f32 %v1033, %v1068
  %v1104 = vadd.f32 %v1034, %v1068
  %v1105 = vadd.f32 %v1035, %v1068
  %v1106 = vadd.f32 %v1036, %v1068
  %v1107 = vadd.f32 %v1037, %v1068
  %v1108 = vadd.f32 %v1038, %v1068
  %v1109 = vadd.f32 %v1039, %v1068
  %v1110 = vadd.f32 %v1040, %v1068
  %v1111 = vadd.f32 %v1041, %v1068
  %v1112 = vadd.f32 %v1042, %v1068
  %v1113 = vadd.f32 %v1043, %v1068
  %v1114 = vadd.f32 %v1044, %v1068
  %v1115 = vadd.f32 %v1045, %v1068
  %v1116 = vadd.f32 %v1046, %v1068
  %v1117 = vadd.f32 %v1047, %v1068
  %v1118 = vadd.f32 %v1048, %v1068
  %v1119 = vadd.f32 %v1049, %v1068
  %v1120 = vadd.f32 %v1050, %v1068
  %v1121 = vadd.f32 %v1051, %v1068
  %v1122 = vadd.f32 %v1052, %v1068
  %v1123 = vadd.f32 %v1053, %v1068
  %v1124 = vadd.f32 %v1054, %v1068
  %v1125 = vadd.f32 %v1055, %v1068
  %v1126 = vadd.f32 %v1056, %v1068
  %v1127 = vadd.f32 %v1057, %v1068
  %v1128 = vadd.f32 %v1058, %v1068
  %v1129 = vadd.f32 %v1059, %v1068
  %v1130 = vadd.f32 %v1060, %v1068
  %v1131 = vadd.f32 %v1061, %v1068
  %v1132 = vadd.f32 %v1062, %v1068
  %v1133 = vadd.f32 %v1063, %v1068
  %v1134 = vmax.f32 %v1070, 0.0
  %v1135 = vmax.f32 %v1071, 0.0
  %v1136 = vmax.f32 %v1072, 0.0
  %v1137 = vmax.f32 %v1073, 0.0
  %v1138 = vmax.f32 %v1074, 0.0
  %v1139 = vmax.f32 %v1075, 0.0
  %v1140 = vmax.f32 %v1076, 0.0
  %v1141 = vmax.f32 %v1077, 0.0
  %v1142 = vmax.f32 %v1078, 0.0
  %v1143 = vmax.f32 %v1079, 0.0
  %v1144 = vmax.f32 %v1080, 0.0
  %v1145 = vmax.f32 %v1081, 0.0
  %v1146 = vmax.f32 %v1082, 0.0
  %v1147 = vmax.f32 %v1083, 0.0
  %v1148 = vmax.f32 %v1084, 0.0
  %v1149 = vmax.f32 %v1085, 0.0
  %v1150 = vmax.f32 %v1086, 0.0
  %v1151 = vmax.f32 %v1087, 0.0
  %v1152 = vmax.f32 %v1088, 0.0
  %v1153 = vmax.f32 %v1089, 0.0
  %v1154 = vmax.f32 %v1090, 0.0
  %v1155 = vmax.f32 %v1091, 0.0
  %v1156 = vmax.f32 %v1092, 0.0
  %v1157 = vmax.f32 %v1093, 0.0
  %v1158 = vmax.f32 %v1094, 0.0
  %v1159 = vmax.f32 %v1095, 0.0
  %v1160 = vmax.f32 %v1096, 0.0
  %v1161 = vmax.f32 %v1097, 0.0
  %v1162 = vmax.f32 %v1098, 0.0
  %v1163 = vmax.f32 %v1099, 0.0
  %v1164 = vmax.f32 %v1100, 0.0
  %v1165 = vmax.f32 %v1101, 0.0
  %v1166 = vmax.f32 %v1102, 0.0
  %v1167 = vmax.f32 %v1103, 0.0
  %v1168 = vmax.f32 %v1104, 0.0
  %v1169 = vmax.f32 %v1105, 0.0
  %v1170 = vmax.f32 %v1106, 0.0
  %v1171 = vmax.f32 %v1107, 0.0
  %v1172 = vmax.f32 %v1108, 0.0
  %v1173 = vmax.f32 %v1109, 0.0
  %v1174 = vmax.f32 %v1110, 0.0
  %v1175 = vmax.f32 %v1111, 0.0
  %v1176 = vmax.f32 %v1112, 0.0
  %v1177 = vmax.f32 %v1113, 0.0
  %v1178 = vmax.f32 %v1114, 0.0
  %v1179 = vmax.f32 %v1115, 0.0
  %v1180 = vmax.f32 %v1116, 0.0
  %v1181 = vmax.f32 %v1117, 0.0
  %v1182 = vmax.f32 %v1118, 0.0
  %v1183 = vmax.f32 %v1119, 0.0
  %v1184 = vmax.f32 %v1120, 0.0
  %v1185 = vmax.f32 %v1121, 0.0
  %v1186 = vmax.f32 %v1122, 0.0
  %v1187 = vmax.f32 %v1123, 0.0
  %v1188 = vmax.f32 %v1124, 0.0
  %v1189 = vmax.f32 %v1125, 0.0
  %v1190 = vmax.f32 %v1126, 0.0
  %v1191 = vmax.f32 %v1127, 0.0
  %v1192 = vmax.f32 %v1128, 0.0
  %v1193 = vmax.f32 %v1129, 0.0
  %v1194 = vmax.f32 %v1130, 0.0
  %v1195 = vmax.f32 %v1131, 0.0
  %v1196 = vmax.f32 %v1132, 0.0
  %v1197 = vmax.f32 %v1133, 0.0
  %1198 = vst.msk [vmem:[%s4] sm:$0xff] %vm652, %v1134
  %1199 = vst.msk [vmem:[%s4 + $0x8] sm:$0xff] %vm652, %v1135
  %1200 = vst.msk [vmem:[%s4 + $0x10] sm:$0xff] %vm652, %v1136
  %1201 = vst.msk [vmem:[%s4 + $0x18] sm:$0xff] %vm652, %v1137
  %1202 = vst.msk [vmem:[%s4 + $0x20] sm:$0xff] %vm652, %v1138
  %1203 = vst.msk [vmem:[%s4 + $0x28] sm:$0xff] %vm652, %v1139
  %1204 = vst.msk [vmem:[%s4 + $0x30] sm:$0xff] %vm652, %v1140
  %1205 = vst.msk [vmem:[%s4 + $0x38] sm:$0xff] %vm652, %v1141
  %1206 = vst.msk [vmem:[%s4 + $0x40] sm:$0xff] %vm652, %v1142
  %1207 = vst.msk [vmem:[%s4 + $0x48] sm:$0xff] %vm652, %v1143
  %1208 = vst.msk [vmem:[%s4 + $0x50] sm:$0xff] %vm652, %v1144
  %1209 = vst.msk [vmem:[%s4 + $0x58] sm:$0xff] %vm652, %v1145
  %1210 = vst.msk [vmem:[%s4 + $0x60] sm:$0xff] %vm652, %v1146
  %1211 = vst.msk [vmem:[%s4 + $0x68] sm:$0xff] %vm652, %v1147
  %1212 = vst.msk [vmem:[%s4 + $0x70] sm:$0xff] %vm652, %v1148
  %1213 = vst.msk [vmem:[%s4 + $0x78] sm:$0xff] %vm652, %v1149
  %1214 = vst.msk [vmem:[%s4 + $0x80] sm:$0xff] %vm652, %v1150
  %1215 = vst.msk [vmem:[%s4 + $0x88] sm:$0xff] %vm652, %v1151
  %1216 = vst.msk [vmem:[%s4 + $0x90] sm:$0xff] %vm652, %v1152
  %1217 = vst.msk [vmem:[%s4 + $0x98] sm:$0xff] %vm652, %v1153
  %1218 = vst.msk [vmem:[%s4 + $0xa0] sm:$0xff] %vm652, %v1154
  %1219 = vst.msk [vmem:[%s4 + $0xa8] sm:$0xff] %vm652, %v1155
  %1220 = vst.msk [vmem:[%s4 + $0xb0] sm:$0xff] %vm652, %v1156
  %1221 = vst.msk [vmem:[%s4 + $0xb8] sm:$0xff] %vm652, %v1157
  %1222 = vst.msk [vmem:[%s4 + $0xc0] sm:$0xff] %vm652, %v1158
  %1223 = vst.msk [vmem:[%s4 + $0xc8] sm:$0xff] %vm652, %v1159
  %1224 = vst.msk [vmem:[%s4 + $0xd0] sm:$0xff] %vm652, %v1160
  %1225 = vst.msk [vmem:[%s4 + $0xd8] sm:$0xff] %vm652, %v1161
  %1226 = vst.msk [vmem:[%s4 + $0xe0] sm:$0xff] %vm652, %v1162
  %1227 = vst.msk [vmem:[%s4 + $0xe8] sm:$0xff] %vm652, %v1163
  %1228 = vst.msk [vmem:[%s4 + $0xf0] sm:$0xff] %vm652, %v1164
  %1229 = vst.msk [vmem:[%s4 + $0xf8] sm:$0xff] %vm652, %v1165
  %1230 = vst.msk [vmem:[%s4 + $0x100] sm:$0xff] %vm652, %v1166
  %1231 = vst.msk [vmem:[%s4 + $0x108] sm:$0xff] %vm652, %v1167
  %1232 = vst.msk [vmem:[%s4 + $0x110] sm:$0xff] %vm652, %v1168
  %1233 = vst.msk [vmem:[%s4 + $0x118] sm:$0xff] %vm652, %v1169
  %1234 = vst.msk [vmem:[%s4 + $0x120] sm:$0xff] %vm652, %v1170
  %1235 = vst.msk [vmem:[%s4 + $0x128] sm:$0xff] %vm652, %v1171
  %1236 = vst.msk [vmem:[%s4 + $0x130] sm:$0xff] %vm652, %v1172
  %1237 = vst.msk [vmem:[%s4 + $0x138] sm:$0xff] %vm652, %v1173
  %1238 = vst.msk [vmem:[%s4 + $0x140] sm:$0xff] %vm652, %v1174
  %1239 = vst.msk [vmem:[%s4 + $0x148] sm:$0xff] %vm652, %v1175
  %1240 = vst.msk [vmem:[%s4 + $0x150] sm:$0xff] %vm652, %v1176
  %1241 = vst.msk [vmem:[%s4 + $0x158] sm:$0xff] %vm652, %v1177
  %1242 = vst.msk [vmem:[%s4 + $0x160] sm:$0xff] %vm652, %v1178
  %1243 = vst.msk [vmem:[%s4 + $0x168] sm:$0xff] %vm652, %v1179
  %1244 = vst.msk [vmem:[%s4 + $0x170] sm:$0xff] %vm652, %v1180
  %1245 = vst.msk [vmem:[%s4 + $0x178] sm:$0xff] %vm652, %v1181
  %1246 = vst.msk [vmem:[%s4 + $0x180] sm:$0xff] %vm652, %v1182
  %1247 = vst.msk [vmem:[%s4 + $0x188] sm:$0xff] %vm652, %v1183
  %1248 = vst.msk [vmem:[%s4 + $0x190] sm:$0xff] %vm652, %v1184
  %1249 = vst.msk [vmem:[%s4 + $0x198] sm:$0xff] %vm652, %v1185
  %1250 = vst.msk [vmem:[%s4 + $0x1a0] sm:$0xff] %vm652, %v1186
  %1251 = vst.msk [vmem:[%s4 + $0x1a8] sm:$0xff] %vm652, %v1187
  %1252 = vst.msk [vmem:[%s4 + $0x1b0] sm:$0xff] %vm652, %v1188
  %1253 = vst.msk [vmem:[%s4 + $0x1b8] sm:$0xff] %vm652, %v1189
  %1254 = vst.msk [vmem:[%s4 + $0x1c0] sm:$0xff] %vm652, %v1190
  %1255 = vst.msk [vmem:[%s4 + $0x1c8] sm:$0xff] %vm652, %v1191
  %1256 = vst.msk [vmem:[%s4 + $0x1d0] sm:$0xff] %vm652, %v1192
  %1257 = vst.msk [vmem:[%s4 + $0x1d8] sm:$0xff] %vm652, %v1193
  %1258 = vst.msk [vmem:[%s4 + $0x1e0] sm:$0xff] %vm652, %v1194
  %1259 = vst.msk [vmem:[%s4 + $0x1e8] sm:$0xff] %vm652, %v1195
  %1260 = vst.msk [vmem:[%s4 + $0x1f0] sm:$0xff] %vm652, %v1196
  %1261 = vst.msk [vmem:[%s4 + $0x1f8] sm:$0xff] %vm652, %v1197
  // Predicated region
  $region18: #{tpu_custom_call.1} parent=0 // pred_check
    _
  $region19: #{tpu_custom_call.1} parent=0 // pred_check_branch
    %1263 = sbr.rel (0) target = $region21
  $region20: #{tpu_custom_call.1} parent=0 // pred_region
    _
  $region21: #{tpu_custom_call.1} parent=0 // pred_fallthru
    _
  // Predicated region
  $region22: #{tpu_custom_call.1} parent=0 // pred_check
    _
  $region23: #{tpu_custom_call.1} parent=0 // pred_check_branch
    %1265 = sbr.rel (0) target = $region25
  $region24: #{tpu_custom_call.1} parent=0 // pred_region
    _
  $region25: #{tpu_custom_call.1} parent=0 // pred_fallthru
    _

</llo_original>
